<compile_context>
chip_gen: v7x
topology: tpu7x:2x2x1
jax: 0.10.0
libtpu: 0.0.40
codegen_flags: <defaults>
</compile_context>

<pallas_src>
import jax
import jax.numpy as jnp
from jax import lax
from jax.experimental import pallas as pl
from jax.experimental.pallas import tpu as pltpu

_LANE = 128   # TPU vreg lane width
_IN = 10      # fc1 in_features
_HID = 5      # fc1 out_features / fc2 in_features


def _mlp_kernel(x_ref, w1_ref, b1_ref, w2_ref, b2_ref, o_ref):
    """One batch tile of the MLP.

    x_ref:  (tb, 10)  input tile, batch-major (straight window of HBM array)
    w1_ref: (5, 10)   fc1.weight (PyTorch (out, in) layout, used directly)
    b1_ref: (5, 1)    fc1.bias as a column
    w2_ref: (5, 1)    fc2.weight as a column
    b2_ref: (1, 1)    fc2.bias
    o_ref:  (1, tb)   output tile, batch on lanes (lane-dense stores)
    """
    # fc1 on the MXU in "NT" orientation: contract the feature axis of both
    # operands -> (5, tb) feature-major, batch lands on the lane axis.
    h = lax.dot_general(
        w1_ref[...], x_ref[...],
        dimension_numbers=(((1,), (1,)), ((), ())),
        precision=lax.Precision.HIGHEST,
        preferred_element_type=jnp.float32)                 # (5, tb)
    h = jnp.maximum(h + b1_ref[...], 0.0)                   # bias + ReLU (VPU)
    # fc2 on the VPU: broadcast multiply + 5-wide sublane reduction.
    y = jnp.sum(h * w2_ref[...], axis=0, keepdims=True) + b2_ref[...]
    o_ref[...] = y.astype(o_ref.dtype)                      # (1, tb) lane-dense


def net_forward(x, w1, b1, w2, b2, *, tb=16 * 1024):
    """Forward pass of Net.

    Args:
      x:  (B, 10) float32
      w1: (5, 10) float32   (PyTorch fc1.weight layout: (out, in))
      b1: (5,)    float32
      w2: (1, 5)  float32
      b2: (1,)    float32
      tb: batch tile; rounded to a multiple of 128, clipped to the padded
          batch, and capped so double-buffered VMEM blocks fit all chips.
    Returns:
      (B, 1) float32
    """
    B = x.shape[0]
    assert x.shape[1] == _IN

    x = x.astype(jnp.float32)

    # Lane-aligned batch tile. Cap at 32K rows: a batch-major (tb, 10) f32
    # block occupies 512 B/row in VMEM (minor dim pads 10 -> 128 lanes), so
    # tb = 32K is ~32 MiB of double-buffered input blocks (v7x has 64 MiB).
    tb = max(_LANE, (tb // _LANE) * _LANE)
    tb = min(tb, 32 * 1024)
    tb = min(tb, pl.cdiv(B, _LANE) * _LANE)
    n_steps = pl.cdiv(B, tb)
    b_pad = n_steps * tb   # output is padded so its grid divides exactly

    w1_c = w1.astype(jnp.float32).reshape(_HID, _IN)        # (5, 10)
    b1_c = b1.astype(jnp.float32).reshape(_HID, 1)          # (5, 1)
    w2_c = w2.astype(jnp.float32).reshape(_HID, 1)          # (1,5) row -> col
    b2_c = b2.astype(jnp.float32).reshape(1, 1)             # (1, 1)

    # Explicit scoped-VMEM budget: double-buffered x blocks (padded to 128
    # lanes) + double-buffered output blocks + headroom. Raises v5e's 16 MiB
    # default when needed, stays well under v7x's 64 MiB physical VMEM.
    x_block_vmem = (tb // 8) * 8 * _LANE * 4     # minor dim 10 pads to 128
    out_block_vmem = 8 * tb * 4                  # sublane dim 1 pads to 8
    vmem_bytes = 2 * (x_block_vmem + out_block_vmem) + (4 << 20)
    vmem_bytes = min(vmem_bytes, 40 << 20)

    cost = pl.CostEstimate(
        flops=2 * B * _IN * _HID + 2 * B * _HID,
        transcendentals=0,
        bytes_accessed=4 * (B * _IN + b_pad
                            + w1_c.size + b1_c.size + w2_c.size + b2_c.size),
    )

    out = pl.pallas_call(
        _mlp_kernel,
        out_shape=jax.ShapeDtypeStruct((1, b_pad), jnp.float32),
        grid=(n_steps,),
        in_specs=[
            pl.BlockSpec((tb, _IN), lambda i: (i, 0)),    # x row window
            pl.BlockSpec((_HID, _IN), lambda i: (0, 0)),  # w1 (resident)
            pl.BlockSpec((_HID, 1), lambda i: (0, 0)),    # b1
            pl.BlockSpec((_HID, 1), lambda i: (0, 0)),    # w2 column
            pl.BlockSpec((1, 1), lambda i: (0, 0)),       # b2
        ],
        out_specs=pl.BlockSpec((1, tb), lambda i: (0, i)),
        compiler_params=pltpu.CompilerParams(
            dimension_semantics=("parallel",),            # megacore on v7x
            vmem_limit_bytes=int(vmem_bytes),
        ),
        cost_estimate=cost,
    )(x, w1_c, b1_c, w2_c, b2_c)

    # Drop padded / out-of-bounds batch columns, return PyTorch-shaped (B, 1).
    return out[0, :B].reshape(B, 1)


def init_params(key):
    """Deterministic parameter init (PyTorch Linear-style uniform bounds)."""
    k1, k2, k3, k4 = jax.random.split(key, 4)
    bound1 = 1.0 / jnp.sqrt(10.0)  # fan_in = 10
    bound2 = 1.0 / jnp.sqrt(5.0)   # fan_in = 5
    w1 = jax.random.uniform(k1, (5, 10), jnp.float32, -bound1, bound1)
    b1 = jax.random.uniform(k2, (5,), jnp.float32, -bound1, bound1)
    w2 = jax.random.uniform(k3, (1, 5), jnp.float32, -bound2, bound2)
    b2 = jax.random.uniform(k4, (1,), jnp.float32, -bound2, bound2)
    return w1, b1, w2, b2


def _reference(x, w1, b1, w2, b2):
    return jnp.maximum(x @ w1.T + b1, 0.0) @ w2.T + b2


if __name__ == "__main__":
    key = jax.random.PRNGKey(0)
    kx1, kx2, kx3, kp = jax.random.split(key, 4)
    w1, b1, w2, b2 = init_params(kp)

    # Small batch: single tile, heavy out-of-bounds tail (dropped on store).
    B = 8
    x = jax.random.normal(kx1, (B, 10), dtype=jnp.float32)
    out = jax.block_until_ready(net_forward(x, w1, b1, w2, b2))
    ref = _reference(x, w1, b1, w2, b2)
    assert out.shape == (B, 1)
    assert jnp.allclose(out, ref, atol=1e-4), "mismatch vs reference (B=8)"

    # Non-multiple-of-128 batch: single clipped tile with a ragged tail.
    B2 = 300
    x2 = jax.random.normal(kx2, (B2, 10), dtype=jnp.float32)
    out2 = jax.block_until_ready(net_forward(x2, w1, b1, w2, b2))
    ref2 = _reference(x2, w1, b1, w2, b2)
    assert out2.shape == (B2, 1)
    assert jnp.allclose(out2, ref2, atol=1e-4), "mismatch vs reference (B=300)"

    # Multi-step grid (8 steps) with a ragged last block.
    B3 = 1000
    x3 = jax.random.normal(kx3, (B3, 10), dtype=jnp.float32)
    out3 = jax.block_until_ready(net_forward(x3, w1, b1, w2, b2, tb=128))
    ref3 = _reference(x3, w1, b1, w2, b2)
    assert out3.shape == (B3, 1)
    assert jnp.allclose(out3, ref3, atol=1e-4), "mismatch vs reference (B=1000)"

    print("KERNEL_OK")
</pallas_src>

<mosaic_0001>
module attributes {stable_mosaic.version = 11 : i64} {
  func.func @_mlp_kernel(%arg0: i32, %arg1: memref<128x10xf32, #tpu.memory_space<vmem>>, %arg2: memref<5x10xf32, #tpu.memory_space<vmem>>, %arg3: memref<5x1xf32, #tpu.memory_space<vmem>>, %arg4: memref<5x1xf32, #tpu.memory_space<vmem>>, %arg5: memref<1x1xf32, #tpu.memory_space<vmem>>, %arg6: memref<1x128xf32, #tpu.memory_space<vmem>>) attributes {dimension_semantics = [#tpu.dimension_semantics<parallel>], iteration_bounds = array<i64: 1>, scalar_prefetch = 0 : i64, scratch_operands = 0 : i64, tpu.core_type = #tpu.core_type<tc>, window_params = [{transform_indices = @transform_0, window_bounds = array<i64: 128, 10>}, {pipeline_mode = #tpu.pipeline_mode<synchronous>, transform_indices = @transform_1, window_bounds = array<i64: 5, 10>}, {pipeline_mode = #tpu.pipeline_mode<synchronous>, transform_indices = @transform_2, window_bounds = array<i64: 5, 1>}, {pipeline_mode = #tpu.pipeline_mode<synchronous>, transform_indices = @transform_3, window_bounds = array<i64: 5, 1>}, {pipeline_mode = #tpu.pipeline_mode<synchronous>, transform_indices = @transform_4, window_bounds = array<i64: 1, 1>}, {transform_indices = @transform_5, window_bounds = array<i64: 1, 128>}]} {
    %c0 = arith.constant 0 : index
    %c0_0 = arith.constant 0 : index
    %0 = vector.load %arg2[%c0, %c0_0] : memref<5x10xf32, #tpu.memory_space<vmem>>, vector<5x10xf32>
    %c0_1 = arith.constant 0 : index
    %c0_2 = arith.constant 0 : index
    %1 = vector.load %arg1[%c0_1, %c0_2] : memref<128x10xf32, #tpu.memory_space<vmem>>, vector<128x10xf32>
    %cst = arith.constant dense<0.000000e+00> : vector<5x128xf32>
    %2 = tpu.matmul %0, %1, %cst {dimension_numbers = #tpu.dot_dimension_numbers<[1], [1], [0], [0], [0, 0, 1, 0], [], []>, precision = #tpu.contract_precision<fp32>} : vector<5x10xf32>, vector<128x10xf32>, vector<5x128xf32> -> vector<5x128xf32>
    %c0_3 = arith.constant 0 : index
    %c0_4 = arith.constant 0 : index
    %3 = vector.load %arg3[%c0_3, %c0_4] : memref<5x1xf32, #tpu.memory_space<vmem>>, vector<5x1xf32>
    %4 = vector.broadcast %3 : vector<5x1xf32> to vector<5x128xf32>
    %5 = arith.addf %2, %4 : vector<5x128xf32>
    %cst_5 = arith.constant 0.000000e+00 : f32
    %6 = vector.broadcast %cst_5 : f32 to vector<5x128xf32>
    %7 = arith.maximumf %5, %6 : vector<5x128xf32>
    %c0_6 = arith.constant 0 : index
    %c0_7 = arith.constant 0 : index
    %8 = vector.load %arg4[%c0_6, %c0_7] : memref<5x1xf32, #tpu.memory_space<vmem>>, vector<5x1xf32>
    %9 = vector.broadcast %8 : vector<5x1xf32> to vector<5x128xf32>
    %10 = arith.mulf %7, %9 : vector<5x128xf32>
    %cst_8 = arith.constant dense<0.000000e+00> : vector<128xf32>
    %11 = vector.multi_reduction <add>, %10, %cst_8 [0] : vector<5x128xf32> to vector<128xf32>
    %12 = vector.shape_cast %11 : vector<128xf32> to vector<1x128xf32>
    %c0_9 = arith.constant 0 : index
    %c0_10 = arith.constant 0 : index
    %13 = vector.load %arg5[%c0_9, %c0_10] : memref<1x1xf32, #tpu.memory_space<vmem>>, vector<1x1xf32>
    %14 = vector.broadcast %13 : vector<1x1xf32> to vector<1x128xf32>
    %15 = arith.addf %12, %14 : vector<1x128xf32>
    %c0_11 = arith.constant 0 : index
    %c0_12 = arith.constant 0 : index
    %16 = vector.load %arg6[%c0_11, %c0_12] : memref<1x128xf32, #tpu.memory_space<vmem>>, vector<1x128xf32>
    tpu.vector_store %arg6[%c0_11, %c0_12], %15 {strides = array<i32>} : memref<1x128xf32, #tpu.memory_space<vmem>>, vector<1x128xf32>,
    return
  }
  func.func @transform_0(%arg0: i32) -> (i32, i32) {
    %c0_i32 = arith.constant 0 : i32
    %c0_i32_0 = arith.constant 0 : i32
    return %arg0, %c0_i32 : i32, i32
  }
  func.func @transform_1(%arg0: i32) -> (i32, i32) {
    %c0_i32 = arith.constant 0 : i32
    %c0_i32_0 = arith.constant 0 : i32
    %c0_i32_1 = arith.constant 0 : i32
    return %c0_i32, %c0_i32_0 : i32, i32
  }
  func.func @transform_2(%arg0: i32) -> (i32, i32) {
    %c0_i32 = arith.constant 0 : i32
    %c0_i32_0 = arith.constant 0 : i32
    %c0_i32_1 = arith.constant 0 : i32
    return %c0_i32, %c0_i32_0 : i32, i32
  }
  func.func @transform_3(%arg0: i32) -> (i32, i32) {
    %c0_i32 = arith.constant 0 : i32
    %c0_i32_0 = arith.constant 0 : i32
    %c0_i32_1 = arith.constant 0 : i32
    return %c0_i32, %c0_i32_0 : i32, i32
  }
  func.func @transform_4(%arg0: i32) -> (i32, i32) {
    %c0_i32 = arith.constant 0 : i32
    %c0_i32_0 = arith.constant 0 : i32
    %c0_i32_1 = arith.constant 0 : i32
    return %c0_i32, %c0_i32_0 : i32, i32
  }
  func.func @transform_5(%arg0: i32) -> (i32, i32) {
    %c0_i32 = arith.constant 0 : i32
    %c0_i32_0 = arith.constant 0 : i32
    return %c0_i32, %arg0 : i32, i32
  }
}

</mosaic_0001>

<llo_original>
// kernel: tpu_custom_call.1
$region0: #{tpu_custom_call.1}
  #allocation0 [shape = 'u32[]', space=smem, size = 0x4, offset = 0x4, fixed_abs, tag = 'smem constant byte address 0x4 - core index']
  #allocation1 [shape = 'u32[144,128]{1,0:T(1,128)}', space=vmem, size = 0x12000, scoped, tag = 'internal scratch']
  #allocation2 [shape = 'f32[1,1]{1,0:T(1,128)S(1)}', space=vmem, size = 0x200, scoped, tag = 'scoped memory for tpu_custom_call.1']
  %s0 = inlined_call_operand.vmem [shape: f32[8,10], index: 0, kind: input, shape index: {}]
  %s1 = inlined_call_operand.vmem [shape: f32[5,10], index: 1, kind: input, shape index: {}]
  %s2 = inlined_call_operand.vmem [shape: f32[5,1], index: 2, kind: input, shape index: {}]
  %s3 = inlined_call_operand.vmem [shape: f32[5,1], index: 3, kind: input, shape index: {}]
  %s4 = inlined_call_operand.<no memory space> [shape: f32[1,1], index: 4, kind: input, shape index: {}]
  %s5 = inlined_call_operand.hbm [shape: f32[1,128], index: 5, kind: output, shape index: {}]
  %s6 = sld [smem:[#allocation0]]
  $region30: #{tpu_custom_call.1} parent=0
    _
  %s8 = ssub.s32 1, %s6
  %s9 = scalar_select 0, %s8, %s6
  %v10 = vstv %s4
  %11 = vst [vmem:[#allocation2] sm:$0x1] %v10
  $region1: #{tpu_custom_call.1} parent=0
    #allocation3 [shape = 'u8[512]{0}', space=vmem, size = 0x400, scoped, tag = 'output window, operand 0, single buffered']
    #allocation4 [shape = 's32[1]{0}', space=sflag, size = 0x4, scoped, tag = 'scoped memory for tpu_custom_call.1']
    %12 = vsyncpa [#allocation4], 0
    // Predicated region
    $region2: #{tpu_custom_call.1} parent=1 // pred_check
      _
    $region3: #{tpu_custom_call.1} parent=1 // pred_check_branch
      %14 = sbr.rel (0) target = $region5
    $region4: #{tpu_custom_call.1} parent=1 // pred_region
      _
    $region5: #{tpu_custom_call.1} parent=1 // pred_fallthru
      _
    // Predicated region
    $region6: #{tpu_custom_call.1} parent=1 // pred_check
      _
    $region7: #{tpu_custom_call.1} parent=1 // pred_check_branch
      %16 = sbr.rel (0) target = $region9
    $region8: #{tpu_custom_call.1} parent=1 // pred_region
      _
    $region9: #{tpu_custom_call.1} parent=1 // pred_fallthru
      _
    // Predicated region
    $region10: #{tpu_custom_call.1} parent=1 // pred_check
      _
    $region11: #{tpu_custom_call.1} parent=1 // pred_check_branch
      %18 = sbr.rel (0) target = $region13
    $region12: #{tpu_custom_call.1} parent=1 // pred_region
      _
    $region13: #{tpu_custom_call.1} parent=1 // pred_fallthru
      _
    // Predicated region
    $region14: #{tpu_custom_call.1} parent=1 // pred_check
      _
    $region15: #{tpu_custom_call.1} parent=1 // pred_check_branch
      %20 = sbr.rel (0) target = $region17
    $region16: #{tpu_custom_call.1} parent=1 // pred_region
      _
    $region17: #{tpu_custom_call.1} parent=1 // pred_fallthru
      _
    // Predicated region
    $region18: #{tpu_custom_call.1} parent=1 // pred_check
      _
    $region19: #{tpu_custom_call.1} parent=1 // pred_check_branch
      %22 = sbr.rel (0) target = $region21
    $region20: #{tpu_custom_call.1} parent=1 // pred_region
      _
    $region21: #{tpu_custom_call.1} parent=1 // pred_fallthru
      _
    %v23 = vld [vmem:[%s1] sm:$0x1f]
    %v24 = vld [vmem:[%s0] sm:$0xff]
    %v25 = vld [vmem:[%s0 + $0x8] sm:$0xff]
    %v26 = vld [vmem:[%s0 + $0x10] sm:$0xff]
    %v27 = vld [vmem:[%s0 + $0x18] sm:$0xff]
    %v28 = vld [vmem:[%s0 + $0x20] sm:$0xff]
    %v29 = vld [vmem:[%s0 + $0x28] sm:$0xff]
    %v30 = vld [vmem:[%s0 + $0x30] sm:$0xff]
    %v31 = vld [vmem:[%s0 + $0x38] sm:$0xff]
    %v32 = vld [vmem:[%s0 + $0x40] sm:$0xff]
    %v33 = vld [vmem:[%s0 + $0x48] sm:$0xff]
    %v34 = vld [vmem:[%s0 + $0x50] sm:$0xff]
    %v35 = vld [vmem:[%s0 + $0x58] sm:$0xff]
    %v36 = vld [vmem:[%s0 + $0x60] sm:$0xff]
    %v37 = vld [vmem:[%s0 + $0x68] sm:$0xff]
    %v38 = vld [vmem:[%s0 + $0x70] sm:$0xff]
    %v39 = vld [vmem:[%s0 + $0x78] sm:$0xff]
    %v40 = vld [vmem:[%s2] sm:$0x1f]
    %42 = vset.pattern.permute.xlu0 0
    %43 = vperm.xlu0 %42, %v40
    %v44 = vpop.permute.xlu0 %43
    %vm46 = vcmask 80896
    %v48 = vsel %vm46, %v23, 0
    %v51 = vsel %vm46, %v24, 0
    %v54 = vsel %vm46, %v25, 0
    %v57 = vsel %vm46, %v26, 0
    %v60 = vsel %vm46, %v27, 0
    %v63 = vsel %vm46, %v28, 0
    %v66 = vsel %vm46, %v29, 0
    %v69 = vsel %vm46, %v30, 0
    %v72 = vsel %vm46, %v31, 0
    %v75 = vsel %vm46, %v32, 0
    %v78 = vsel %vm46, %v33, 0
    %v81 = vsel %vm46, %v34, 0
    %v84 = vsel %vm46, %v35, 0
    %v87 = vsel %vm46, %v36, 0
    %v90 = vsel %vm46, %v37, 0
    %v93 = vsel %vm46, %v38, 0
    %v96 = vsel %vm46, %v39, 0
    %98 = vmatprep.subr.mxu0 0.0
    %v99 = vand.u32 %v51, 4294901760
    %100 = vmatpush1.xpose.msra.mxu0 %v99
    %101 = vmatprep.subr.mxu0 0.0
    %v102 = vand.u32 %v54, 4294901760
    %103 = vmatpush1.xpose.msra.mxu0 %v102
    %104 = vmatprep.subr.mxu0 0.0
    %v105 = vand.u32 %v57, 4294901760
    %106 = vmatpush1.xpose.msra.mxu0 %v105
    %107 = vmatprep.subr.mxu0 0.0
    %v108 = vand.u32 %v60, 4294901760
    %109 = vmatpush1.xpose.msra.mxu0 %v108
    %110 = vmatprep.subr.mxu0 0.0
    %v111 = vand.u32 %v63, 4294901760
    %112 = vmatpush1.xpose.msra.mxu0 %v111
    %113 = vmatprep.subr.mxu0 0.0
    %v114 = vand.u32 %v66, 4294901760
    %115 = vmatpush1.xpose.msra.mxu0 %v114
    %116 = vmatprep.subr.mxu0 0.0
    %v117 = vand.u32 %v69, 4294901760
    %118 = vmatpush1.xpose.msra.mxu0 %v117
    %119 = vmatprep.subr.mxu0 0.0
    %v120 = vand.u32 %v72, 4294901760
    %121 = vmatpush1.xpose.msra.mxu0 %v120
    %122 = vmatprep.subr.mxu0 0.0
    %v123 = vand.u32 %v75, 4294901760
    %124 = vmatpush1.xpose.msra.mxu0 %v123
    %125 = vmatprep.subr.mxu0 0.0
    %v126 = vand.u32 %v78, 4294901760
    %127 = vmatpush1.xpose.msra.mxu0 %v126
    %128 = vmatprep.subr.mxu0 0.0
    %v129 = vand.u32 %v81, 4294901760
    %130 = vmatpush1.xpose.msra.mxu0 %v129
    %131 = vmatprep.subr.mxu0 0.0
    %v132 = vand.u32 %v84, 4294901760
    %133 = vmatpush1.xpose.msra.mxu0 %v132
    %134 = vmatprep.subr.mxu0 0.0
    %v135 = vand.u32 %v87, 4294901760
    %136 = vmatpush1.xpose.msra.mxu0 %v135
    %137 = vmatprep.subr.mxu0 0.0
    %v138 = vand.u32 %v90, 4294901760
    %139 = vmatpush1.xpose.msra.mxu0 %v138
    %140 = vmatprep.subr.mxu0 0.0
    %v141 = vand.u32 %v93, 4294901760
    %142 = vmatpush1.xpose.msra.mxu0 %v141
    %143 = vmatprep.subr.mxu0 0.0
    %v144 = vand.u32 %v96, 4294901760
    %145 = vmatpush1.xpose.msra.mxu0 %v144
    %146 = vmatprep.subr.mxu0 0.0
    %147 = vmatpush1.xpose.msra.mxu0 0.0
    %148 = vmatprep.subr.mxu0 0.0
    %149 = vmatpush1.xpose.msra.mxu0 0.0
    %150 = vmatprep.subr.mxu0 0.0
    %151 = vmatpush1.xpose.msra.mxu0 0.0
    %152 = vmatprep.subr.mxu0 0.0
    %153 = vmatpush1.xpose.msra.mxu0 0.0
    %154 = vmatprep.subr.mxu0 0.0
    %155 = vmatpush1.xpose.msra.mxu0 0.0
    %156 = vmatprep.subr.mxu0 0.0
    %157 = vmatpush1.xpose.msra.mxu0 0.0
    %158 = vmatprep.subr.mxu0 0.0
    %159 = vmatpush1.xpose.msra.mxu0 0.0
    %160 = vmatprep.subr.mxu0 0.0
    %161 = vmatpush1.xpose.msra.mxu0 0.0
    %162 = vmatprep.subr.mxu0 0.0
    %163 = vmatpush1.xpose.msra.mxu0 0.0
    %164 = vmatprep.subr.mxu0 0.0
    %165 = vmatpush1.xpose.msra.mxu0 0.0
    %166 = vmatprep.subr.mxu0 0.0
    %167 = vmatpush1.xpose.msra.mxu0 0.0
    %168 = vmatprep.subr.mxu0 0.0
    %169 = vmatpush1.xpose.msra.mxu0 0.0
    %170 = vmatprep.subr.mxu0 0.0
    %171 = vmatpush1.xpose.msra.mxu0 0.0
    %172 = vmatprep.subr.mxu0 0.0
    %173 = vmatpush1.xpose.msra.mxu0 0.0
    %174 = vmatprep.subr.mxu0 0.0
    %175 = vmatpush1.xpose.msra.mxu0 0.0
    %176 = vmatprep.subr.mxu0 0.0
    %177 = vmatpush1.xpose.msra.mxu0 0.0
    %178 = vmatprep.mubr.f32.mxu0 0.0
    %v179 = vand.u32 %v48, 4294901760
    %v180 = vsub.f32 %v48, %v179
    %v181 = vand.u32 %v180, 4294901760
    %v182 = vsub.f32 %v180, %v181
    %v183 = vand.u32 %v182, 4294901760
    %184 = vmatmul.mubr.f32.gmra.mrb[0].mxu0 %v183
    %v185 = vpop.f32.mrb[0].mxu0
    %v186 = vadd.f32 %v44, %v185
    %v187 = vpop.f32.mrb[0].mxu0
    %188 = vdwg.mxu0
    %189 = vmatprep.subr.mxu0 0.0
    %v190 = vand.u32 %v51, 4294901760
    %v191 = vsub.f32 %v51, %v190
    %v192 = vand.u32 %v191, 4294901760
    %v193 = vsub.f32 %v191, %v192
    %v194 = vand.u32 %v193, 4294901760
    %195 = vmatpush1.xpose.msra.mxu0 %v194
    %196 = vmatprep.subr.mxu0 0.0
    %v197 = vand.u32 %v54, 4294901760
    %v198 = vsub.f32 %v54, %v197
    %v199 = vand.u32 %v198, 4294901760
    %v200 = vsub.f32 %v198, %v199
    %v201 = vand.u32 %v200, 4294901760
    %202 = vmatpush1.xpose.msra.mxu0 %v201
    %203 = vmatprep.subr.mxu0 0.0
    %v204 = vand.u32 %v57, 4294901760
    %v205 = vsub.f32 %v57, %v204
    %v206 = vand.u32 %v205, 4294901760
    %v207 = vsub.f32 %v205, %v206
    %v208 = vand.u32 %v207, 4294901760
    %209 = vmatpush1.xpose.msra.mxu0 %v208
    %210 = vmatprep.subr.mxu0 0.0
    %v211 = vand.u32 %v60, 4294901760
    %v212 = vsub.f32 %v60, %v211
    %v213 = vand.u32 %v212, 4294901760
    %v214 = vsub.f32 %v212, %v213
    %v215 = vand.u32 %v214, 4294901760
    %216 = vmatpush1.xpose.msra.mxu0 %v215
    %217 = vmatprep.subr.mxu0 0.0
    %v218 = vand.u32 %v63, 4294901760
    %v219 = vsub.f32 %v63, %v218
    %v220 = vand.u32 %v219, 4294901760
    %v221 = vsub.f32 %v219, %v220
    %v222 = vand.u32 %v221, 4294901760
    %223 = vmatpush1.xpose.msra.mxu0 %v222
    %224 = vmatprep.subr.mxu0 0.0
    %v225 = vand.u32 %v66, 4294901760
    %v226 = vsub.f32 %v66, %v225
    %v227 = vand.u32 %v226, 4294901760
    %v228 = vsub.f32 %v226, %v227
    %v229 = vand.u32 %v228, 4294901760
    %230 = vmatpush1.xpose.msra.mxu0 %v229
    %231 = vmatprep.subr.mxu0 0.0
    %v232 = vand.u32 %v69, 4294901760
    %v233 = vsub.f32 %v69, %v232
    %v234 = vand.u32 %v233, 4294901760
    %v235 = vsub.f32 %v233, %v234
    %v236 = vand.u32 %v235, 4294901760
    %237 = vmatpush1.xpose.msra.mxu0 %v236
    %238 = vmatprep.subr.mxu0 0.0
    %v239 = vand.u32 %v72, 4294901760
    %v240 = vsub.f32 %v72, %v239
    %v241 = vand.u32 %v240, 4294901760
    %v242 = vsub.f32 %v240, %v241
    %v243 = vand.u32 %v242, 4294901760
    %244 = vmatpush1.xpose.msra.mxu0 %v243
    %245 = vmatprep.subr.mxu0 0.0
    %v246 = vand.u32 %v75, 4294901760
    %v247 = vsub.f32 %v75, %v246
    %v248 = vand.u32 %v247, 4294901760
    %v249 = vsub.f32 %v247, %v248
    %v250 = vand.u32 %v249, 4294901760
    %251 = vmatpush1.xpose.msra.mxu0 %v250
    %252 = vmatprep.subr.mxu0 0.0
    %v253 = vand.u32 %v78, 4294901760
    %v254 = vsub.f32 %v78, %v253
    %v255 = vand.u32 %v254, 4294901760
    %v256 = vsub.f32 %v254, %v255
    %v257 = vand.u32 %v256, 4294901760
    %258 = vmatpush1.xpose.msra.mxu0 %v257
    %259 = vmatprep.subr.mxu0 0.0
    %v260 = vand.u32 %v81, 4294901760
    %v261 = vsub.f32 %v81, %v260
    %v262 = vand.u32 %v261, 4294901760
    %v263 = vsub.f32 %v261, %v262
    %v264 = vand.u32 %v263, 4294901760
    %265 = vmatpush1.xpose.msra.mxu0 %v264
    %266 = vmatprep.subr.mxu0 0.0
    %v267 = vand.u32 %v84, 4294901760
    %v268 = vsub.f32 %v84, %v267
    %v269 = vand.u32 %v268, 4294901760
    %v270 = vsub.f32 %v268, %v269
    %v271 = vand.u32 %v270, 4294901760
    %272 = vmatpush1.xpose.msra.mxu0 %v271
    %273 = vmatprep.subr.mxu0 0.0
    %v274 = vand.u32 %v87, 4294901760
    %v275 = vsub.f32 %v87, %v274
    %v276 = vand.u32 %v275, 4294901760
    %v277 = vsub.f32 %v275, %v276
    %v278 = vand.u32 %v277, 4294901760
    %279 = vmatpush1.xpose.msra.mxu0 %v278
    %280 = vmatprep.subr.mxu0 0.0
    %v281 = vand.u32 %v90, 4294901760
    %v282 = vsub.f32 %v90, %v281
    %v283 = vand.u32 %v282, 4294901760
    %v284 = vsub.f32 %v282, %v283
    %v285 = vand.u32 %v284, 4294901760
    %286 = vmatpush1.xpose.msra.mxu0 %v285
    %287 = vmatprep.subr.mxu0 0.0
    %v288 = vand.u32 %v93, 4294901760
    %v289 = vsub.f32 %v93, %v288
    %v290 = vand.u32 %v289, 4294901760
    %v291 = vsub.f32 %v289, %v290
    %v292 = vand.u32 %v291, 4294901760
    %293 = vmatpush1.xpose.msra.mxu0 %v292
    %294 = vmatprep.subr.mxu0 0.0
    %v295 = vand.u32 %v96, 4294901760
    %v296 = vsub.f32 %v96, %v295
    %v297 = vand.u32 %v296, 4294901760
    %v298 = vsub.f32 %v296, %v297
    %v299 = vand.u32 %v298, 4294901760
    %300 = vmatpush1.xpose.msra.mxu0 %v299
    %301 = vmatprep.subr.mxu0 0.0
    %302 = vmatpush1.xpose.msra.mxu0 0.0
    %303 = vmatprep.subr.mxu0 0.0
    %304 = vmatpush1.xpose.msra.mxu0 0.0
    %305 = vmatprep.subr.mxu0 0.0
    %306 = vmatpush1.xpose.msra.mxu0 0.0
    %307 = vmatprep.subr.mxu0 0.0
    %308 = vmatpush1.xpose.msra.mxu0 0.0
    %309 = vmatprep.subr.mxu0 0.0
    %310 = vmatpush1.xpose.msra.mxu0 0.0
    %311 = vmatprep.subr.mxu0 0.0
    %312 = vmatpush1.xpose.msra.mxu0 0.0
    %313 = vmatprep.subr.mxu0 0.0
    %314 = vmatpush1.xpose.msra.mxu0 0.0
    %315 = vmatprep.subr.mxu0 0.0
    %316 = vmatpush1.xpose.msra.mxu0 0.0
    %317 = vmatprep.subr.mxu0 0.0
    %318 = vmatpush1.xpose.msra.mxu0 0.0
    %319 = vmatprep.subr.mxu0 0.0
    %320 = vmatpush1.xpose.msra.mxu0 0.0
    %321 = vmatprep.subr.mxu0 0.0
    %322 = vmatpush1.xpose.msra.mxu0 0.0
    %323 = vmatprep.subr.mxu0 0.0
    %324 = vmatpush1.xpose.msra.mxu0 0.0
    %325 = vmatprep.subr.mxu0 0.0
    %326 = vmatpush1.xpose.msra.mxu0 0.0
    %327 = vmatprep.subr.mxu0 0.0
    %328 = vmatpush1.xpose.msra.mxu0 0.0
    %329 = vmatprep.subr.mxu0 0.0
    %330 = vmatpush1.xpose.msra.mxu0 0.0
    %331 = vmatprep.subr.mxu0 0.0
    %332 = vmatpush1.xpose.msra.mxu0 0.0
    %333 = vmatprep.mubr.f32.mxu0 0.0
    %v334 = vand.u32 %v48, 4294901760
    %335 = vmatmul.mubr.f32.gmra.mrb[0].mxu0 %v334
    %v336 = vpop.f32.mrb[0].mxu0
    %v337 = vadd.f32 %v186, %v336
    %v338 = vpop.f32.mrb[0].mxu0
    %339 = vdwg.mxu0
    %340 = vmatprep.subr.mxu0 0.0
    %v341 = vand.u32 %v51, 4294901760
    %v342 = vsub.f32 %v51, %v341
    %343 = vmatpush1.xpose.msra.mxu0 %v342
    %344 = vmatprep.subr.mxu0 0.0
    %v345 = vand.u32 %v54, 4294901760
    %v346 = vsub.f32 %v54, %v345
    %347 = vmatpush1.xpose.msra.mxu0 %v346
    %348 = vmatprep.subr.mxu0 0.0
    %v349 = vand.u32 %v57, 4294901760
    %v350 = vsub.f32 %v57, %v349
    %351 = vmatpush1.xpose.msra.mxu0 %v350
    %352 = vmatprep.subr.mxu0 0.0
    %v353 = vand.u32 %v60, 4294901760
    %v354 = vsub.f32 %v60, %v353
    %355 = vmatpush1.xpose.msra.mxu0 %v354
    %356 = vmatprep.subr.mxu0 0.0
    %v357 = vand.u32 %v63, 4294901760
    %v358 = vsub.f32 %v63, %v357
    %359 = vmatpush1.xpose.msra.mxu0 %v358
    %360 = vmatprep.subr.mxu0 0.0
    %v361 = vand.u32 %v66, 4294901760
    %v362 = vsub.f32 %v66, %v361
    %363 = vmatpush1.xpose.msra.mxu0 %v362
    %364 = vmatprep.subr.mxu0 0.0
    %v365 = vand.u32 %v69, 4294901760
    %v366 = vsub.f32 %v69, %v365
    %367 = vmatpush1.xpose.msra.mxu0 %v366
    %368 = vmatprep.subr.mxu0 0.0
    %v369 = vand.u32 %v72, 4294901760
    %v370 = vsub.f32 %v72, %v369
    %371 = vmatpush1.xpose.msra.mxu0 %v370
    %372 = vmatprep.subr.mxu0 0.0
    %v373 = vand.u32 %v75, 4294901760
    %v374 = vsub.f32 %v75, %v373
    %375 = vmatpush1.xpose.msra.mxu0 %v374
    %376 = vmatprep.subr.mxu0 0.0
    %v377 = vand.u32 %v78, 4294901760
    %v378 = vsub.f32 %v78, %v377
    %379 = vmatpush1.xpose.msra.mxu0 %v378
    %380 = vmatprep.subr.mxu0 0.0
    %v381 = vand.u32 %v81, 4294901760
    %v382 = vsub.f32 %v81, %v381
    %383 = vmatpush1.xpose.msra.mxu0 %v382
    %384 = vmatprep.subr.mxu0 0.0
    %v385 = vand.u32 %v84, 4294901760
    %v386 = vsub.f32 %v84, %v385
    %387 = vmatpush1.xpose.msra.mxu0 %v386
    %388 = vmatprep.subr.mxu0 0.0
    %v389 = vand.u32 %v87, 4294901760
    %v390 = vsub.f32 %v87, %v389
    %391 = vmatpush1.xpose.msra.mxu0 %v390
    %392 = vmatprep.subr.mxu0 0.0
    %v393 = vand.u32 %v90, 4294901760
    %v394 = vsub.f32 %v90, %v393
    %395 = vmatpush1.xpose.msra.mxu0 %v394
    %396 = vmatprep.subr.mxu0 0.0
    %v397 = vand.u32 %v93, 4294901760
    %v398 = vsub.f32 %v93, %v397
    %399 = vmatpush1.xpose.msra.mxu0 %v398
    %400 = vmatprep.subr.mxu0 0.0
    %v401 = vand.u32 %v96, 4294901760
    %v402 = vsub.f32 %v96, %v401
    %403 = vmatpush1.xpose.msra.mxu0 %v402
    %404 = vmatprep.subr.mxu0 0.0
    %405 = vmatpush1.xpose.msra.mxu0 0.0
    %406 = vmatprep.subr.mxu0 0.0
    %407 = vmatpush1.xpose.msra.mxu0 0.0
    %408 = vmatprep.subr.mxu0 0.0
    %409 = vmatpush1.xpose.msra.mxu0 0.0
    %410 = vmatprep.subr.mxu0 0.0
    %411 = vmatpush1.xpose.msra.mxu0 0.0
    %412 = vmatprep.subr.mxu0 0.0
    %413 = vmatpush1.xpose.msra.mxu0 0.0
    %414 = vmatprep.subr.mxu0 0.0
    %415 = vmatpush1.xpose.msra.mxu0 0.0
    %416 = vmatprep.subr.mxu0 0.0
    %417 = vmatpush1.xpose.msra.mxu0 0.0
    %418 = vmatprep.subr.mxu0 0.0
    %419 = vmatpush1.xpose.msra.mxu0 0.0
    %420 = vmatprep.subr.mxu0 0.0
    %421 = vmatpush1.xpose.msra.mxu0 0.0
    %422 = vmatprep.subr.mxu0 0.0
    %423 = vmatpush1.xpose.msra.mxu0 0.0
    %424 = vmatprep.subr.mxu0 0.0
    %425 = vmatpush1.xpose.msra.mxu0 0.0
    %426 = vmatprep.subr.mxu0 0.0
    %427 = vmatpush1.xpose.msra.mxu0 0.0
    %428 = vmatprep.subr.mxu0 0.0
    %429 = vmatpush1.xpose.msra.mxu0 0.0
    %430 = vmatprep.subr.mxu0 0.0
    %431 = vmatpush1.xpose.msra.mxu0 0.0
    %432 = vmatprep.subr.mxu0 0.0
    %433 = vmatpush1.xpose.msra.mxu0 0.0
    %434 = vmatprep.subr.mxu0 0.0
    %435 = vmatpush1.xpose.msra.mxu0 0.0
    %436 = vmatprep.mubr.f32.mxu0 0.0
    %v437 = vand.u32 %v48, 4294901760
    %v438 = vsub.f32 %v48, %v437
    %439 = vmatmul.mubr.f32.gmra.mrb[0].mxu0 %v438
    %v440 = vpop.f32.mrb[0].mxu0
    %v441 = vadd.f32 %v337, %v440
    %v442 = vpop.f32.mrb[0].mxu0
    %443 = vdwg.mxu0
    %444 = vmatprep.subr.mxu0 0.0
    %v445 = vand.u32 %v51, 4294901760
    %446 = vmatpush1.xpose.msra.mxu0 %v445
    %447 = vmatprep.subr.mxu0 0.0
    %v448 = vand.u32 %v54, 4294901760
    %449 = vmatpush1.xpose.msra.mxu0 %v448
    %450 = vmatprep.subr.mxu0 0.0
    %v451 = vand.u32 %v57, 4294901760
    %452 = vmatpush1.xpose.msra.mxu0 %v451
    %453 = vmatprep.subr.mxu0 0.0
    %v454 = vand.u32 %v60, 4294901760
    %455 = vmatpush1.xpose.msra.mxu0 %v454
    %456 = vmatprep.subr.mxu0 0.0
    %v457 = vand.u32 %v63, 4294901760
    %458 = vmatpush1.xpose.msra.mxu0 %v457
    %459 = vmatprep.subr.mxu0 0.0
    %v460 = vand.u32 %v66, 4294901760
    %461 = vmatpush1.xpose.msra.mxu0 %v460
    %462 = vmatprep.subr.mxu0 0.0
    %v463 = vand.u32 %v69, 4294901760
    %464 = vmatpush1.xpose.msra.mxu0 %v463
    %465 = vmatprep.subr.mxu0 0.0
    %v466 = vand.u32 %v72, 4294901760
    %467 = vmatpush1.xpose.msra.mxu0 %v466
    %468 = vmatprep.subr.mxu0 0.0
    %v469 = vand.u32 %v75, 4294901760
    %470 = vmatpush1.xpose.msra.mxu0 %v469
    %471 = vmatprep.subr.mxu0 0.0
    %v472 = vand.u32 %v78, 4294901760
    %473 = vmatpush1.xpose.msra.mxu0 %v472
    %474 = vmatprep.subr.mxu0 0.0
    %v475 = vand.u32 %v81, 4294901760
    %476 = vmatpush1.xpose.msra.mxu0 %v475
    %477 = vmatprep.subr.mxu0 0.0
    %v478 = vand.u32 %v84, 4294901760
    %479 = vmatpush1.xpose.msra.mxu0 %v478
    %480 = vmatprep.subr.mxu0 0.0
    %v481 = vand.u32 %v87, 4294901760
    %482 = vmatpush1.xpose.msra.mxu0 %v481
    %483 = vmatprep.subr.mxu0 0.0
    %v484 = vand.u32 %v90, 4294901760
    %485 = vmatpush1.xpose.msra.mxu0 %v484
    %486 = vmatprep.subr.mxu0 0.0
    %v487 = vand.u32 %v93, 4294901760
    %488 = vmatpush1.xpose.msra.mxu0 %v487
    %489 = vmatprep.subr.mxu0 0.0
    %v490 = vand.u32 %v96, 4294901760
    %491 = vmatpush1.xpose.msra.mxu0 %v490
    %492 = vmatprep.subr.mxu0 0.0
    %493 = vmatpush1.xpose.msra.mxu0 0.0
    %494 = vmatprep.subr.mxu0 0.0
    %495 = vmatpush1.xpose.msra.mxu0 0.0
    %496 = vmatprep.subr.mxu0 0.0
    %497 = vmatpush1.xpose.msra.mxu0 0.0
    %498 = vmatprep.subr.mxu0 0.0
    %499 = vmatpush1.xpose.msra.mxu0 0.0
    %500 = vmatprep.subr.mxu0 0.0
    %501 = vmatpush1.xpose.msra.mxu0 0.0
    %502 = vmatprep.subr.mxu0 0.0
    %503 = vmatpush1.xpose.msra.mxu0 0.0
    %504 = vmatprep.subr.mxu0 0.0
    %505 = vmatpush1.xpose.msra.mxu0 0.0
    %506 = vmatprep.subr.mxu0 0.0
    %507 = vmatpush1.xpose.msra.mxu0 0.0
    %508 = vmatprep.subr.mxu0 0.0
    %509 = vmatpush1.xpose.msra.mxu0 0.0
    %510 = vmatprep.subr.mxu0 0.0
    %511 = vmatpush1.xpose.msra.mxu0 0.0
    %512 = vmatprep.subr.mxu0 0.0
    %513 = vmatpush1.xpose.msra.mxu0 0.0
    %514 = vmatprep.subr.mxu0 0.0
    %515 = vmatpush1.xpose.msra.mxu0 0.0
    %516 = vmatprep.subr.mxu0 0.0
    %517 = vmatpush1.xpose.msra.mxu0 0.0
    %518 = vmatprep.subr.mxu0 0.0
    %519 = vmatpush1.xpose.msra.mxu0 0.0
    %520 = vmatprep.subr.mxu0 0.0
    %521 = vmatpush1.xpose.msra.mxu0 0.0
    %522 = vmatprep.subr.mxu0 0.0
    %523 = vmatpush1.xpose.msra.mxu0 0.0
    %524 = vmatprep.mubr.f32.mxu0 0.0
    %v525 = vand.u32 %v48, 4294901760
    %v526 = vsub.f32 %v48, %v525
    %v527 = vand.u32 %v526, 4294901760
    %528 = vmatmul.mubr.f32.gmra.mrb[0].mxu0 %v527
    %v529 = vpop.f32.mrb[0].mxu0
    %v530 = vadd.f32 %v441, %v529
    %v531 = vpop.f32.mrb[0].mxu0
    %532 = vdwg.mxu0
    %533 = vmatprep.subr.mxu0 0.0
    %v534 = vand.u32 %v51, 4294901760
    %v535 = vsub.f32 %v51, %v534
    %v536 = vand.u32 %v535, 4294901760
    %537 = vmatpush1.xpose.msra.mxu0 %v536
    %538 = vmatprep.subr.mxu0 0.0
    %v539 = vand.u32 %v54, 4294901760
    %v540 = vsub.f32 %v54, %v539
    %v541 = vand.u32 %v540, 4294901760
    %542 = vmatpush1.xpose.msra.mxu0 %v541
    %543 = vmatprep.subr.mxu0 0.0
    %v544 = vand.u32 %v57, 4294901760
    %v545 = vsub.f32 %v57, %v544
    %v546 = vand.u32 %v545, 4294901760
    %547 = vmatpush1.xpose.msra.mxu0 %v546
    %548 = vmatprep.subr.mxu0 0.0
    %v549 = vand.u32 %v60, 4294901760
    %v550 = vsub.f32 %v60, %v549
    %v551 = vand.u32 %v550, 4294901760
    %552 = vmatpush1.xpose.msra.mxu0 %v551
    %553 = vmatprep.subr.mxu0 0.0
    %v554 = vand.u32 %v63, 4294901760
    %v555 = vsub.f32 %v63, %v554
    %v556 = vand.u32 %v555, 4294901760
    %557 = vmatpush1.xpose.msra.mxu0 %v556
    %558 = vmatprep.subr.mxu0 0.0
    %v559 = vand.u32 %v66, 4294901760
    %v560 = vsub.f32 %v66, %v559
    %v561 = vand.u32 %v560, 4294901760
    %562 = vmatpush1.xpose.msra.mxu0 %v561
    %563 = vmatprep.subr.mxu0 0.0
    %v564 = vand.u32 %v69, 4294901760
    %v565 = vsub.f32 %v69, %v564
    %v566 = vand.u32 %v565, 4294901760
    %567 = vmatpush1.xpose.msra.mxu0 %v566
    %568 = vmatprep.subr.mxu0 0.0
    %v569 = vand.u32 %v72, 4294901760
    %v570 = vsub.f32 %v72, %v569
    %v571 = vand.u32 %v570, 4294901760
    %572 = vmatpush1.xpose.msra.mxu0 %v571
    %573 = vmatprep.subr.mxu0 0.0
    %v574 = vand.u32 %v75, 4294901760
    %v575 = vsub.f32 %v75, %v574
    %v576 = vand.u32 %v575, 4294901760
    %577 = vmatpush1.xpose.msra.mxu0 %v576
    %578 = vmatprep.subr.mxu0 0.0
    %v579 = vand.u32 %v78, 4294901760
    %v580 = vsub.f32 %v78, %v579
    %v581 = vand.u32 %v580, 4294901760
    %582 = vmatpush1.xpose.msra.mxu0 %v581
    %583 = vmatprep.subr.mxu0 0.0
    %v584 = vand.u32 %v81, 4294901760
    %v585 = vsub.f32 %v81, %v584
    %v586 = vand.u32 %v585, 4294901760
    %587 = vmatpush1.xpose.msra.mxu0 %v586
    %588 = vmatprep.subr.mxu0 0.0
    %v589 = vand.u32 %v84, 4294901760
    %v590 = vsub.f32 %v84, %v589
    %v591 = vand.u32 %v590, 4294901760
    %592 = vmatpush1.xpose.msra.mxu0 %v591
    %593 = vmatprep.subr.mxu0 0.0
    %v594 = vand.u32 %v87, 4294901760
    %v595 = vsub.f32 %v87, %v594
    %v596 = vand.u32 %v595, 4294901760
    %597 = vmatpush1.xpose.msra.mxu0 %v596
    %598 = vmatprep.subr.mxu0 0.0
    %v599 = vand.u32 %v90, 4294901760
    %v600 = vsub.f32 %v90, %v599
    %v601 = vand.u32 %v600, 4294901760
    %602 = vmatpush1.xpose.msra.mxu0 %v601
    %603 = vmatprep.subr.mxu0 0.0
    %v604 = vand.u32 %v93, 4294901760
    %v605 = vsub.f32 %v93, %v604
    %v606 = vand.u32 %v605, 4294901760
    %607 = vmatpush1.xpose.msra.mxu0 %v606
    %608 = vmatprep.subr.mxu0 0.0
    %v609 = vand.u32 %v96, 4294901760
    %v610 = vsub.f32 %v96, %v609
    %v611 = vand.u32 %v610, 4294901760
    %612 = vmatpush1.xpose.msra.mxu0 %v611
    %613 = vmatprep.subr.mxu0 0.0
    %614 = vmatpush1.xpose.msra.mxu0 0.0
    %615 = vmatprep.subr.mxu0 0.0
    %616 = vmatpush1.xpose.msra.mxu0 0.0
    %617 = vmatprep.subr.mxu0 0.0
    %618 = vmatpush1.xpose.msra.mxu0 0.0
    %619 = vmatprep.subr.mxu0 0.0
    %620 = vmatpush1.xpose.msra.mxu0 0.0
    %621 = vmatprep.subr.mxu0 0.0
    %622 = vmatpush1.xpose.msra.mxu0 0.0
    %623 = vmatprep.subr.mxu0 0.0
    %624 = vmatpush1.xpose.msra.mxu0 0.0
    %625 = vmatprep.subr.mxu0 0.0
    %626 = vmatpush1.xpose.msra.mxu0 0.0
    %627 = vmatprep.subr.mxu0 0.0
    %628 = vmatpush1.xpose.msra.mxu0 0.0
    %629 = vmatprep.subr.mxu0 0.0
    %630 = vmatpush1.xpose.msra.mxu0 0.0
    %631 = vmatprep.subr.mxu0 0.0
    %632 = vmatpush1.xpose.msra.mxu0 0.0
    %633 = vmatprep.subr.mxu0 0.0
    %634 = vmatpush1.xpose.msra.mxu0 0.0
    %635 = vmatprep.subr.mxu0 0.0
    %636 = vmatpush1.xpose.msra.mxu0 0.0
    %637 = vmatprep.subr.mxu0 0.0
    %638 = vmatpush1.xpose.msra.mxu0 0.0
    %639 = vmatprep.subr.mxu0 0.0
    %640 = vmatpush1.xpose.msra.mxu0 0.0
    %641 = vmatprep.subr.mxu0 0.0
    %642 = vmatpush1.xpose.msra.mxu0 0.0
    %643 = vmatprep.subr.mxu0 0.0
    %644 = vmatpush1.xpose.msra.mxu0 0.0
    %645 = vmatprep.mubr.f32.mxu0 0.0
    %v646 = vand.u32 %v48, 4294901760
    %647 = vmatmul.mubr.f32.gmra.mrb[0].mxu0 %v646
    %v648 = vpop.f32.mrb[0].mxu0
    %v649 = vadd.f32 %v530, %v648
    %v650 = vpop.f32.mrb[0].mxu0
    %651 = vdwg.mxu0
    %652 = vmatprep.subr.mxu0 0.0
    %v653 = vand.u32 %v51, 4294901760
    %654 = vmatpush1.xpose.msra.mxu0 %v653
    %655 = vmatprep.subr.mxu0 0.0
    %v656 = vand.u32 %v54, 4294901760
    %657 = vmatpush1.xpose.msra.mxu0 %v656
    %658 = vmatprep.subr.mxu0 0.0
    %v659 = vand.u32 %v57, 4294901760
    %660 = vmatpush1.xpose.msra.mxu0 %v659
    %661 = vmatprep.subr.mxu0 0.0
    %v662 = vand.u32 %v60, 4294901760
    %663 = vmatpush1.xpose.msra.mxu0 %v662
    %664 = vmatprep.subr.mxu0 0.0
    %v665 = vand.u32 %v63, 4294901760
    %666 = vmatpush1.xpose.msra.mxu0 %v665
    %667 = vmatprep.subr.mxu0 0.0
    %v668 = vand.u32 %v66, 4294901760
    %669 = vmatpush1.xpose.msra.mxu0 %v668
    %670 = vmatprep.subr.mxu0 0.0
    %v671 = vand.u32 %v69, 4294901760
    %672 = vmatpush1.xpose.msra.mxu0 %v671
    %673 = vmatprep.subr.mxu0 0.0
    %v674 = vand.u32 %v72, 4294901760
    %675 = vmatpush1.xpose.msra.mxu0 %v674
    %676 = vmatprep.subr.mxu0 0.0
    %v677 = vand.u32 %v75, 4294901760
    %678 = vmatpush1.xpose.msra.mxu0 %v677
    %679 = vmatprep.subr.mxu0 0.0
    %v680 = vand.u32 %v78, 4294901760
    %681 = vmatpush1.xpose.msra.mxu0 %v680
    %682 = vmatprep.subr.mxu0 0.0
    %v683 = vand.u32 %v81, 4294901760
    %684 = vmatpush1.xpose.msra.mxu0 %v683
    %685 = vmatprep.subr.mxu0 0.0
    %v686 = vand.u32 %v84, 4294901760
    %687 = vmatpush1.xpose.msra.mxu0 %v686
    %688 = vmatprep.subr.mxu0 0.0
    %v689 = vand.u32 %v87, 4294901760
    %690 = vmatpush1.xpose.msra.mxu0 %v689
    %691 = vmatprep.subr.mxu0 0.0
    %v692 = vand.u32 %v90, 4294901760
    %693 = vmatpush1.xpose.msra.mxu0 %v692
    %694 = vmatprep.subr.mxu0 0.0
    %v695 = vand.u32 %v93, 4294901760
    %696 = vmatpush1.xpose.msra.mxu0 %v695
    %697 = vmatprep.subr.mxu0 0.0
    %v698 = vand.u32 %v96, 4294901760
    %699 = vmatpush1.xpose.msra.mxu0 %v698
    %700 = vmatprep.subr.mxu0 0.0
    %701 = vmatpush1.xpose.msra.mxu0 0.0
    %702 = vmatprep.subr.mxu0 0.0
    %703 = vmatpush1.xpose.msra.mxu0 0.0
    %704 = vmatprep.subr.mxu0 0.0
    %705 = vmatpush1.xpose.msra.mxu0 0.0
    %706 = vmatprep.subr.mxu0 0.0
    %707 = vmatpush1.xpose.msra.mxu0 0.0
    %708 = vmatprep.subr.mxu0 0.0
    %709 = vmatpush1.xpose.msra.mxu0 0.0
    %710 = vmatprep.subr.mxu0 0.0
    %711 = vmatpush1.xpose.msra.mxu0 0.0
    %712 = vmatprep.subr.mxu0 0.0
    %713 = vmatpush1.xpose.msra.mxu0 0.0
    %714 = vmatprep.subr.mxu0 0.0
    %715 = vmatpush1.xpose.msra.mxu0 0.0
    %716 = vmatprep.subr.mxu0 0.0
    %717 = vmatpush1.xpose.msra.mxu0 0.0
    %718 = vmatprep.subr.mxu0 0.0
    %719 = vmatpush1.xpose.msra.mxu0 0.0
    %720 = vmatprep.subr.mxu0 0.0
    %721 = vmatpush1.xpose.msra.mxu0 0.0
    %722 = vmatprep.subr.mxu0 0.0
    %723 = vmatpush1.xpose.msra.mxu0 0.0
    %724 = vmatprep.subr.mxu0 0.0
    %725 = vmatpush1.xpose.msra.mxu0 0.0
    %726 = vmatprep.subr.mxu0 0.0
    %727 = vmatpush1.xpose.msra.mxu0 0.0
    %728 = vmatprep.subr.mxu0 0.0
    %729 = vmatpush1.xpose.msra.mxu0 0.0
    %730 = vmatprep.subr.mxu0 0.0
    %731 = vmatpush1.xpose.msra.mxu0 0.0
    %732 = vmatprep.mubr.f32.mxu0 0.0
    %v733 = vand.u32 %v48, 4294901760
    %734 = vmatmul.mubr.f32.gmra.mrb[0].mxu0 %v733
    %v735 = vpop.f32.mrb[0].mxu0
    %v736 = vadd.f32 %v649, %v735
    %v737 = vpop.f32.mrb[0].mxu0
    %738 = vdwg.mxu0
    %v739 = vmax.f32 %v736, 0.0
    %v740 = vld [vmem:[%s3] sm:$0x1f]
    %742 = vset.pattern.permute.xlu0 0
    %743 = vperm.xlu0 %742, %v740
    %v744 = vpop.permute.xlu0 %743
    %v746 = vmul.f32 %v739, %v744
    %vm747 = vcmask 1044480
    %v748 = vsel %vm747, %v746, 0.0
    %v749 = vrot.slane %v748, 4
    %v750 = vadd.f32 %v748, %v749
    %v751 = vrot.slane %v750, 2
    %v752 = vadd.f32 %v750, %v751
    %v753 = vrot.slane %v752, 1
    %v754 = vadd.f32 %v752, %v753
    %v755 = vld [vmem:[#allocation2] sm:$0x1]
    %757 = vset.pattern.permute.xlu0 0
    %758 = vperm.xlu0 %757, %v755
    %v759 = vpop.permute.xlu0 %758
    %v761 = vlaneseq
    %v762 = vshrl.u32 %v761, 7
    %v763 = vsub.s32 0, %v762
    %v764 = vrot.slane %v759, %v763
    %v765 = vadd.f32 %v754, %v764
    %766 = vst [vmem:[#allocation3] sm:$0x1] %v765
    // Predicated region
    $region22: #{tpu_custom_call.1} parent=1 // pred_check
      _
    $region23: #{tpu_custom_call.1} parent=1 // pred_check_branch
      %768 = sbr.rel (0) target = $region25
    $region24: #{tpu_custom_call.1} parent=1 // pred_region
      %s770 = ssub.s32 16, 16
      %771 = vsyncadd [#allocation4], %s770
      %s773 = sshll.u32 [#allocation3], 4
      %s774 = int_to_ptr.vmem [resolvable:$true] %s773
      %776 = dma.vmem_to_hbm [thread:$0]  %s774, 16, %s5, [#allocation4]
    $region25: #{tpu_custom_call.1} parent=1 // pred_fallthru
      _
    // Predicated region
    $region26: #{tpu_custom_call.1} parent=1 // pred_check
      _
    $region27: #{tpu_custom_call.1} parent=1 // pred_check_branch
      %778 = sbr.rel (0) target = $region29
    $region28: #{tpu_custom_call.1} parent=1 // pred_region
      %779 = dma.done [#allocation4], 16
    $region29: #{tpu_custom_call.1} parent=1 // pred_fallthru
      _
    %780 = vsyncpa [#allocation4], 1

</llo_original>
